<compile_context>
chip_gen: v7x
topology: tpu7x:2x2x1
jax: 0.10.0
libtpu: 0.0.40
codegen_flags: <defaults>
</compile_context>

<pallas_src>
import functools

import jax
import jax.numpy as jnp
from jax.experimental import pallas as pl
from jax.experimental.pallas import tpu as pltpu

# CartPole-v1 dimensions implied by the module
STATE_DIM = 4
HIDDEN_DIM = 128
ACTION_DIM = 2

_LANE = 128             # TPU lane width
_DEFAULT_TILE_B = 512   # batch lanes per grid step


def qvalue_kernel(x_ref, w1_ref, w2_ref, b2_ref, o_ref):
    """One batch tile.

    x_ref : (S+1, TB)  f32   (augmented input, batch on lanes)
    w1_ref: (H, S+1)   f32   (fc1 weights with b1 folded in)
    w2_ref: (A, H)     f32
    b2_ref: (A, 1)     f32
    o_ref : (A, TB)    f32
    """
    # fc1 (+ folded b1) on the MXU, f32 accumulation.
    h = jnp.dot(w1_ref[...], x_ref[...], preferred_element_type=jnp.float32)
    # ReLU on the VPU.
    h = jnp.maximum(h, 0.0)
    # fc2 on the MXU, then broadcast-add b2.
    q = jnp.dot(w2_ref[...], h, preferred_element_type=jnp.float32)
    o_ref[...] = (q + b2_ref[...]).astype(o_ref.dtype)


@functools.partial(jax.jit, static_argnames=("tile_b",))
def qvalue_net(x, w1, b1, w2, b2, *, tile_b=_DEFAULT_TILE_B):
    """x: (B, state_dim) f32 -> (B, action_dim) f32 (module semantics)."""
    B, S = x.shape
    H = w1.shape[1]
    A = w2.shape[1]

    # ---------------- layout plumbing (wrapper-side) ----------------------
    # Fold b1 into fc1 via an extra constant-ones input feature.
    w1_aug = jnp.concatenate([w1, b1.reshape(1, H)], axis=0)       # (S+1, H)
    w1t = w1_aug.T.astype(jnp.float32)                             # (H, S+1)
    w2t = w2.T.astype(jnp.float32)                                 # (A, H)
    b2c = b2.reshape(A, 1).astype(jnp.float32)                     # (A, 1)

    x_aug = jnp.concatenate(
        [x, jnp.ones((B, 1), dtype=x.dtype)], axis=1)              # (B, S+1)
    xt = x_aug.T.astype(jnp.float32)                               # (S+1, B)

    # Pad the batch (lane) axis to a multiple of the tile size.
    bp = pl.cdiv(B, _LANE) * _LANE
    tb = bp if bp <= tile_b else tile_b          # tile_b must be a 128-multiple
    bp = pl.cdiv(bp, tb) * tb
    xt = jnp.pad(xt, ((0, 0), (0, bp - B)))

    grid = (bp // tb,)
    out_t = pl.pallas_call(
        qvalue_kernel,
        out_shape=jax.ShapeDtypeStruct((A, bp), jnp.float32),
        grid_spec=pltpu.PrefetchScalarGridSpec(
            num_scalar_prefetch=0,
            grid=grid,
            in_specs=[
                pl.BlockSpec((S + 1, tb), lambda i: (0, i)),   # batch tile
                pl.BlockSpec((H, S + 1), lambda i: (0, 0)),    # resident
                pl.BlockSpec((A, H), lambda i: (0, 0)),        # resident
                pl.BlockSpec((A, 1), lambda i: (0, 0)),        # resident
            ],
            out_specs=pl.BlockSpec((A, tb), lambda i: (0, i)),
        ),
        compiler_params=pltpu.CompilerParams(
            dimension_semantics=("parallel",)),
    )(xt, w1t, w2t, b2c)

    # Back to the module's (B, action_dim) interface.
    return out_t[:, :B].T


def init_params(key):
    """Deterministic init mimicking torch.nn.Linear (uniform +/- 1/sqrt(fan_in)).
    Weights are stored as (in_features, out_features)."""
    k1, k2, k3, k4 = jax.random.split(key, 4)
    bound1 = 1.0 / jnp.sqrt(STATE_DIM)
    bound2 = 1.0 / jnp.sqrt(HIDDEN_DIM)
    w1 = jax.random.uniform(k1, (STATE_DIM, HIDDEN_DIM), jnp.float32,
                            -bound1, bound1)
    b1 = jax.random.uniform(k2, (HIDDEN_DIM,), jnp.float32, -bound1, bound1)
    w2 = jax.random.uniform(k3, (HIDDEN_DIM, ACTION_DIM), jnp.float32,
                            -bound2, bound2)
    b2 = jax.random.uniform(k4, (ACTION_DIM,), jnp.float32, -bound2, bound2)
    return w1, b1, w2, b2


def _reference(x, w1, b1, w2, b2):
    """Pure-JAX f32 reference (module semantics)."""
    h = jnp.maximum(jnp.dot(x, w1) + b1, 0.0)
    return jnp.dot(h, w2) + b2


if __name__ == "__main__":
    key = jax.random.PRNGKey(0)
    kx, kp, kx2 = jax.random.split(key, 3)
    w1, b1, w2, b2 = init_params(kp)

    # --- small shape from the module (inference-style batch) ---------------
    batch = 2
    x = jax.random.normal(kx, (batch, STATE_DIM), jnp.float32)
    q = jax.block_until_ready(qvalue_net(x, w1, b1, w2, b2))
    assert q.shape == (batch, ACTION_DIM)

    ref = _reference(x, w1, b1, w2, b2)
    assert jnp.allclose(q, ref, atol=1e-5, rtol=1e-5), "mismatch vs reference"

    # --- exercise the multi-tile grid + padding path ------------------------
    batch2 = 300
    x2 = jax.random.normal(kx2, (batch2, STATE_DIM), jnp.float32)
    q2 = jax.block_until_ready(qvalue_net(x2, w1, b1, w2, b2, tile_b=128))
    ref2 = _reference(x2, w1, b1, w2, b2)
    assert q2.shape == (batch2, ACTION_DIM)
    assert jnp.allclose(q2, ref2, atol=1e-5, rtol=1e-5), "mismatch (tiled)"

    print("KERNEL_OK")
</pallas_src>

<mosaic_0001>
module attributes {stable_mosaic.version = 11 : i64} {
  func.func @qvalue_kernel(%arg0: i32, %arg1: memref<5x128xf32, #tpu.memory_space<vmem>>, %arg2: memref<128x5xf32, #tpu.memory_space<vmem>>, %arg3: memref<2x128xf32, #tpu.memory_space<vmem>>, %arg4: memref<2x1xf32, #tpu.memory_space<vmem>>, %arg5: memref<2x128xf32, #tpu.memory_space<vmem>>) attributes {dimension_semantics = [#tpu.dimension_semantics<parallel>], iteration_bounds = array<i64: 1>, scalar_prefetch = 0 : i64, scratch_operands = 0 : i64, tpu.core_type = #tpu.core_type<tc>, window_params = [{transform_indices = @transform_0, window_bounds = array<i64: 5, 128>}, {pipeline_mode = #tpu.pipeline_mode<synchronous>, transform_indices = @transform_1, window_bounds = array<i64: 128, 5>}, {pipeline_mode = #tpu.pipeline_mode<synchronous>, transform_indices = @transform_2, window_bounds = array<i64: 2, 128>}, {pipeline_mode = #tpu.pipeline_mode<synchronous>, transform_indices = @transform_3, window_bounds = array<i64: 2, 1>}, {transform_indices = @transform_4, window_bounds = array<i64: 2, 128>}]} {
    %c0 = arith.constant 0 : index
    %c0_0 = arith.constant 0 : index
    %0 = vector.load %arg2[%c0, %c0_0] : memref<128x5xf32, #tpu.memory_space<vmem>>, vector<128x5xf32>
    %c0_1 = arith.constant 0 : index
    %c0_2 = arith.constant 0 : index
    %1 = vector.load %arg1[%c0_1, %c0_2] : memref<5x128xf32, #tpu.memory_space<vmem>>, vector<5x128xf32>
    %cst = arith.constant dense<0.000000e+00> : vector<128x128xf32>
    %2 = tpu.matmul %0, %1, %cst {dimension_numbers = #tpu.dot_dimension_numbers<[1], [0], [0], [1], [0, 0, 1, 1], [], []>} : vector<128x5xf32>, vector<5x128xf32>, vector<128x128xf32> -> vector<128x128xf32>
    %cst_3 = arith.constant 0.000000e+00 : f32
    %3 = vector.broadcast %cst_3 : f32 to vector<128x128xf32>
    %4 = arith.maximumf %2, %3 : vector<128x128xf32>
    %c0_4 = arith.constant 0 : index
    %c0_5 = arith.constant 0 : index
    %5 = vector.load %arg3[%c0_4, %c0_5] : memref<2x128xf32, #tpu.memory_space<vmem>>, vector<2x128xf32>
    %cst_6 = arith.constant dense<0.000000e+00> : vector<2x128xf32>
    %6 = tpu.matmul %5, %4, %cst_6 {dimension_numbers = #tpu.dot_dimension_numbers<[1], [0], [0], [1], [0, 0, 1, 1], [], []>} : vector<2x128xf32>, vector<128x128xf32>, vector<2x128xf32> -> vector<2x128xf32>
    %c0_7 = arith.constant 0 : index
    %c0_8 = arith.constant 0 : index
    %7 = vector.load %arg4[%c0_7, %c0_8] : memref<2x1xf32, #tpu.memory_space<vmem>>, vector<2x1xf32>
    %8 = vector.broadcast %7 : vector<2x1xf32> to vector<2x128xf32>
    %9 = arith.addf %6, %8 : vector<2x128xf32>
    %c0_9 = arith.constant 0 : index
    %c0_10 = arith.constant 0 : index
    %10 = vector.load %arg5[%c0_9, %c0_10] : memref<2x128xf32, #tpu.memory_space<vmem>>, vector<2x128xf32>
    tpu.vector_store %arg5[%c0_9, %c0_10], %9 {strides = array<i32>} : memref<2x128xf32, #tpu.memory_space<vmem>>, vector<2x128xf32>,
    return
  }
  func.func @transform_0(%arg0: i32) -> (i32, i32) {
    %c0_i32 = arith.constant 0 : i32
    %c0_i32_0 = arith.constant 0 : i32
    return %c0_i32, %arg0 : i32, i32
  }
  func.func @transform_1(%arg0: i32) -> (i32, i32) {
    %c0_i32 = arith.constant 0 : i32
    %c0_i32_0 = arith.constant 0 : i32
    %c0_i32_1 = arith.constant 0 : i32
    return %c0_i32, %c0_i32_0 : i32, i32
  }
  func.func @transform_2(%arg0: i32) -> (i32, i32) {
    %c0_i32 = arith.constant 0 : i32
    %c0_i32_0 = arith.constant 0 : i32
    %c0_i32_1 = arith.constant 0 : i32
    return %c0_i32, %c0_i32_0 : i32, i32
  }
  func.func @transform_3(%arg0: i32) -> (i32, i32) {
    %c0_i32 = arith.constant 0 : i32
    %c0_i32_0 = arith.constant 0 : i32
    %c0_i32_1 = arith.constant 0 : i32
    return %c0_i32, %c0_i32_0 : i32, i32
  }
  func.func @transform_4(%arg0: i32) -> (i32, i32) {
    %c0_i32 = arith.constant 0 : i32
    %c0_i32_0 = arith.constant 0 : i32
    return %c0_i32, %arg0 : i32, i32
  }
}

</mosaic_0001>

<llo_original>
// kernel: qvalue_net.1
$region0: #{qvalue_net.1}
  #allocation0 [shape = 'u32[]', space=smem, size = 0x4, offset = 0x4, fixed_abs, tag = 'smem constant byte address 0x4 - core index']
  #allocation1 [shape = 'u32[144,128]{1,0:T(1,128)}', space=vmem, size = 0x12000, scoped, tag = 'internal scratch']
  %s0 = inlined_call_operand.vmem [shape: f32[5,128], index: 0, kind: input, shape index: {}]
  %s1 = inlined_call_operand.vmem [shape: f32[128,5], index: 1, kind: input, shape index: {}]
  %s2 = inlined_call_operand.vmem [shape: f32[2,128], index: 2, kind: input, shape index: {}]
  %s3 = inlined_call_operand.vmem [shape: f32[2,1], index: 3, kind: input, shape index: {}]
  %s4 = inlined_call_operand.vmem [shape: f32[2,128], index: 4, kind: output, shape index: {}]
  %s5 = sld [smem:[#allocation0]]
  $region26: #{qvalue_net.1} parent=0
    _
  %s7 = ssub.s32 1, %s5
  %s8 = scalar_select 0, %s7, %s5
  // Predicated region
  $region2: #{qvalue_net.1} parent=0 // pred_check
    _
  $region3: #{qvalue_net.1} parent=0 // pred_check_branch
    %10 = sbr.rel (0) target = $region5
  $region4: #{qvalue_net.1} parent=0 // pred_region
    _
  $region5: #{qvalue_net.1} parent=0 // pred_fallthru
    _
  // Predicated region
  $region6: #{qvalue_net.1} parent=0 // pred_check
    _
  $region7: #{qvalue_net.1} parent=0 // pred_check_branch
    %12 = sbr.rel (0) target = $region9
  $region8: #{qvalue_net.1} parent=0 // pred_region
    _
  $region9: #{qvalue_net.1} parent=0 // pred_fallthru
    _
  // Predicated region
  $region10: #{qvalue_net.1} parent=0 // pred_check
    _
  $region11: #{qvalue_net.1} parent=0 // pred_check_branch
    %14 = sbr.rel (0) target = $region13
  $region12: #{qvalue_net.1} parent=0 // pred_region
    _
  $region13: #{qvalue_net.1} parent=0 // pred_fallthru
    _
  // Predicated region
  $region14: #{qvalue_net.1} parent=0 // pred_check
    _
  $region15: #{qvalue_net.1} parent=0 // pred_check_branch
    %16 = sbr.rel (0) target = $region17
  $region16: #{qvalue_net.1} parent=0 // pred_region
    _
  $region17: #{qvalue_net.1} parent=0 // pred_fallthru
    _
  %v17 = vld [vmem:[%s1] sm:$0xff]
  %v18 = vld [vmem:[%s1 + $0x8] sm:$0xff]
  %v19 = vld [vmem:[%s1 + $0x10] sm:$0xff]
  %v20 = vld [vmem:[%s1 + $0x18] sm:$0xff]
  %v21 = vld [vmem:[%s1 + $0x20] sm:$0xff]
  %v22 = vld [vmem:[%s1 + $0x28] sm:$0xff]
  %v23 = vld [vmem:[%s1 + $0x30] sm:$0xff]
  %v24 = vld [vmem:[%s1 + $0x38] sm:$0xff]
  %v25 = vld [vmem:[%s1 + $0x40] sm:$0xff]
  %v26 = vld [vmem:[%s1 + $0x48] sm:$0xff]
  %v27 = vld [vmem:[%s1 + $0x50] sm:$0xff]
  %v28 = vld [vmem:[%s1 + $0x58] sm:$0xff]
  %v29 = vld [vmem:[%s1 + $0x60] sm:$0xff]
  %v30 = vld [vmem:[%s1 + $0x68] sm:$0xff]
  %v31 = vld [vmem:[%s1 + $0x70] sm:$0xff]
  %v32 = vld [vmem:[%s1 + $0x78] sm:$0xff]
  %v33 = vld [vmem:[%s0] sm:$0x1f]
  %vm34 = vcmask 39936
  %v36 = vsel %vm34, %v17, 0
  %v39 = vsel %vm34, %v18, 0
  %v42 = vsel %vm34, %v19, 0
  %v45 = vsel %vm34, %v20, 0
  %v48 = vsel %vm34, %v21, 0
  %v51 = vsel %vm34, %v22, 0
  %v54 = vsel %vm34, %v23, 0
  %v57 = vsel %vm34, %v24, 0
  %v60 = vsel %vm34, %v25, 0
  %v63 = vsel %vm34, %v26, 0
  %v66 = vsel %vm34, %v27, 0
  %v69 = vsel %vm34, %v28, 0
  %v72 = vsel %vm34, %v29, 0
  %v75 = vsel %vm34, %v30, 0
  %v78 = vsel %vm34, %v31, 0
  %v81 = vsel %vm34, %v32, 0
  %vm83 = vcmask 1044480
  %v85 = vsel %vm83, %v33, 0
  %87 = vmatprep.subr.mxu0 0.0
  %88 = vmatpush1.msra.mxu0 %v85
  %89 = vmatprep.subr.mxu0 0.0
  %90 = vmatpush1.msra.mxu0 0.0
  %91 = vmatprep.subr.mxu0 0.0
  %92 = vmatpush1.msra.mxu0 0.0
  %93 = vmatprep.subr.mxu0 0.0
  %94 = vmatpush1.msra.mxu0 0.0
  %95 = vmatprep.subr.mxu0 0.0
  %96 = vmatpush1.msra.mxu0 0.0
  %97 = vmatprep.subr.mxu0 0.0
  %98 = vmatpush1.msra.mxu0 0.0
  %99 = vmatprep.subr.mxu0 0.0
  %100 = vmatpush1.msra.mxu0 0.0
  %101 = vmatprep.subr.mxu0 0.0
  %102 = vmatpush1.msra.mxu0 0.0
  %103 = vmatprep.subr.mxu0 0.0
  %104 = vmatpush1.msra.mxu0 0.0
  %105 = vmatprep.subr.mxu0 0.0
  %106 = vmatpush1.msra.mxu0 0.0
  %107 = vmatprep.subr.mxu0 0.0
  %108 = vmatpush1.msra.mxu0 0.0
  %109 = vmatprep.subr.mxu0 0.0
  %110 = vmatpush1.msra.mxu0 0.0
  %111 = vmatprep.subr.mxu0 0.0
  %112 = vmatpush1.msra.mxu0 0.0
  %113 = vmatprep.subr.mxu0 0.0
  %114 = vmatpush1.msra.mxu0 0.0
  %115 = vmatprep.subr.mxu0 0.0
  %116 = vmatpush1.msra.mxu0 0.0
  %117 = vmatprep.subr.mxu0 0.0
  %118 = vmatpush1.msra.mxu0 0.0
  %119 = vmatprep.subr.mxu0 0.0
  %120 = vmatpush1.msra.mxu0 0.0
  %121 = vmatprep.subr.mxu0 0.0
  %122 = vmatpush1.msra.mxu0 0.0
  %123 = vmatprep.subr.mxu0 0.0
  %124 = vmatpush1.msra.mxu0 0.0
  %125 = vmatprep.subr.mxu0 0.0
  %126 = vmatpush1.msra.mxu0 0.0
  %127 = vmatprep.subr.mxu0 0.0
  %128 = vmatpush1.msra.mxu0 0.0
  %129 = vmatprep.subr.mxu0 0.0
  %130 = vmatpush1.msra.mxu0 0.0
  %131 = vmatprep.subr.mxu0 0.0
  %132 = vmatpush1.msra.mxu0 0.0
  %133 = vmatprep.subr.mxu0 0.0
  %134 = vmatpush1.msra.mxu0 0.0
  %135 = vmatprep.subr.mxu0 0.0
  %136 = vmatpush1.msra.mxu0 0.0
  %137 = vmatprep.subr.mxu0 0.0
  %138 = vmatpush1.msra.mxu0 0.0
  %139 = vmatprep.subr.mxu0 0.0
  %140 = vmatpush1.msra.mxu0 0.0
  %141 = vmatprep.subr.mxu0 0.0
  %142 = vmatpush1.msra.mxu0 0.0
  %143 = vmatprep.subr.mxu0 0.0
  %144 = vmatpush1.msra.mxu0 0.0
  %145 = vmatprep.subr.mxu0 0.0
  %146 = vmatpush1.msra.mxu0 0.0
  %147 = vmatprep.subr.mxu0 0.0
  %148 = vmatpush1.msra.mxu0 0.0
  %149 = vmatprep.subr.mxu0 0.0
  %150 = vmatpush1.msra.mxu0 0.0
  %151 = vmatprep.mubr.f32.mxu0 0.0
  %152 = vmatmul.mubr.f32.gmra.mrb[0].mxu0 %v36
  %v153 = vpop.f32.mrb[0].mxu0
  %v154 = vadd.f32 0.0, %v153
  %v155 = vpop.f32.mrb[0].mxu0
  %156 = vmatprep.mubr.f32.mxu0 0.0
  %157 = vmatmul.mubr.f32.gmra.mrb[0].mxu0 %v39
  %v158 = vpop.f32.mrb[0].mxu0
  %v159 = vadd.f32 0.0, %v158
  %v160 = vpop.f32.mrb[0].mxu0
  %161 = vmatprep.mubr.f32.mxu0 0.0
  %162 = vmatmul.mubr.f32.gmra.mrb[0].mxu0 %v42
  %v163 = vpop.f32.mrb[0].mxu0
  %v164 = vadd.f32 0.0, %v163
  %v165 = vpop.f32.mrb[0].mxu0
  %166 = vmatprep.mubr.f32.mxu0 0.0
  %167 = vmatmul.mubr.f32.gmra.mrb[0].mxu0 %v45
  %v168 = vpop.f32.mrb[0].mxu0
  %v169 = vadd.f32 0.0, %v168
  %v170 = vpop.f32.mrb[0].mxu0
  %171 = vmatprep.mubr.f32.mxu0 0.0
  %172 = vmatmul.mubr.f32.gmra.mrb[0].mxu0 %v48
  %v173 = vpop.f32.mrb[0].mxu0
  %v174 = vadd.f32 0.0, %v173
  %v175 = vpop.f32.mrb[0].mxu0
  %176 = vmatprep.mubr.f32.mxu0 0.0
  %177 = vmatmul.mubr.f32.gmra.mrb[0].mxu0 %v51
  %v178 = vpop.f32.mrb[0].mxu0
  %v179 = vadd.f32 0.0, %v178
  %v180 = vpop.f32.mrb[0].mxu0
  %181 = vmatprep.mubr.f32.mxu0 0.0
  %182 = vmatmul.mubr.f32.gmra.mrb[0].mxu0 %v54
  %v183 = vpop.f32.mrb[0].mxu0
  %v184 = vadd.f32 0.0, %v183
  %v185 = vpop.f32.mrb[0].mxu0
  %186 = vmatprep.mubr.f32.mxu0 0.0
  %187 = vmatmul.mubr.f32.gmra.mrb[0].mxu0 %v57
  %v188 = vpop.f32.mrb[0].mxu0
  %v189 = vadd.f32 0.0, %v188
  %v190 = vpop.f32.mrb[0].mxu0
  %191 = vmatprep.mubr.f32.mxu0 0.0
  %192 = vmatmul.mubr.f32.gmra.mrb[0].mxu0 %v60
  %v193 = vpop.f32.mrb[0].mxu0
  %v194 = vadd.f32 0.0, %v193
  %v195 = vpop.f32.mrb[0].mxu0
  %196 = vmatprep.mubr.f32.mxu0 0.0
  %197 = vmatmul.mubr.f32.gmra.mrb[0].mxu0 %v63
  %v198 = vpop.f32.mrb[0].mxu0
  %v199 = vadd.f32 0.0, %v198
  %v200 = vpop.f32.mrb[0].mxu0
  %201 = vmatprep.mubr.f32.mxu0 0.0
  %202 = vmatmul.mubr.f32.gmra.mrb[0].mxu0 %v66
  %v203 = vpop.f32.mrb[0].mxu0
  %v204 = vadd.f32 0.0, %v203
  %v205 = vpop.f32.mrb[0].mxu0
  %206 = vmatprep.mubr.f32.mxu0 0.0
  %207 = vmatmul.mubr.f32.gmra.mrb[0].mxu0 %v69
  %v208 = vpop.f32.mrb[0].mxu0
  %v209 = vadd.f32 0.0, %v208
  %v210 = vpop.f32.mrb[0].mxu0
  %211 = vmatprep.mubr.f32.mxu0 0.0
  %212 = vmatmul.mubr.f32.gmra.mrb[0].mxu0 %v72
  %v213 = vpop.f32.mrb[0].mxu0
  %v214 = vadd.f32 0.0, %v213
  %v215 = vpop.f32.mrb[0].mxu0
  %216 = vmatprep.mubr.f32.mxu0 0.0
  %217 = vmatmul.mubr.f32.gmra.mrb[0].mxu0 %v75
  %v218 = vpop.f32.mrb[0].mxu0
  %v219 = vadd.f32 0.0, %v218
  %v220 = vpop.f32.mrb[0].mxu0
  %221 = vmatprep.mubr.f32.mxu0 0.0
  %222 = vmatmul.mubr.f32.gmra.mrb[0].mxu0 %v78
  %v223 = vpop.f32.mrb[0].mxu0
  %v224 = vadd.f32 0.0, %v223
  %v225 = vpop.f32.mrb[0].mxu0
  %226 = vmatprep.mubr.f32.mxu0 0.0
  %227 = vmatmul.mubr.f32.gmra.mrb[0].mxu0 %v81
  %v228 = vpop.f32.mrb[0].mxu0
  %v229 = vadd.f32 0.0, %v228
  %v230 = vpop.f32.mrb[0].mxu0
  %231 = vdwg.mxu0
  %v232 = vmax.f32 %v154, 0.0
  %v233 = vmax.f32 %v159, 0.0
  %v234 = vmax.f32 %v164, 0.0
  %v235 = vmax.f32 %v169, 0.0
  %v236 = vmax.f32 %v174, 0.0
  %v237 = vmax.f32 %v179, 0.0
  %v238 = vmax.f32 %v184, 0.0
  %v239 = vmax.f32 %v189, 0.0
  %v240 = vmax.f32 %v194, 0.0
  %v241 = vmax.f32 %v199, 0.0
  %v242 = vmax.f32 %v204, 0.0
  %v243 = vmax.f32 %v209, 0.0
  %v244 = vmax.f32 %v214, 0.0
  %v245 = vmax.f32 %v219, 0.0
  %v246 = vmax.f32 %v224, 0.0
  %v247 = vmax.f32 %v229, 0.0
  %v248 = vld [vmem:[%s2] sm:$0x3]
  %v249 = vld [vmem:[%s3] sm:$0x3]
  %251 = vset.pattern.permute.xlu0 0
  %252 = vperm.xlu0 %251, %v249
  %v253 = vpop.permute.xlu0 %252
  %255 = vmatprep.subr.mxu0 0.0
  %256 = vmatpush1.msra.mxu0 %v232
  %257 = vmatprep.subr.mxu0 0.0
  %258 = vmatpush1.msra.mxu0 %v233
  %259 = vmatprep.subr.mxu0 0.0
  %260 = vmatpush1.msra.mxu0 %v234
  %261 = vmatprep.subr.mxu0 0.0
  %262 = vmatpush1.msra.mxu0 %v235
  %263 = vmatprep.subr.mxu0 0.0
  %264 = vmatpush1.msra.mxu0 %v236
  %265 = vmatprep.subr.mxu0 0.0
  %266 = vmatpush1.msra.mxu0 %v237
  %267 = vmatprep.subr.mxu0 0.0
  %268 = vmatpush1.msra.mxu0 %v238
  %269 = vmatprep.subr.mxu0 0.0
  %270 = vmatpush1.msra.mxu0 %v239
  %271 = vmatprep.subr.mxu0 0.0
  %272 = vmatpush1.msra.mxu0 %v240
  %273 = vmatprep.subr.mxu0 0.0
  %274 = vmatpush1.msra.mxu0 %v241
  %275 = vmatprep.subr.mxu0 0.0
  %276 = vmatpush1.msra.mxu0 %v242
  %277 = vmatprep.subr.mxu0 0.0
  %278 = vmatpush1.msra.mxu0 %v243
  %279 = vmatprep.subr.mxu0 0.0
  %280 = vmatpush1.msra.mxu0 %v244
  %281 = vmatprep.subr.mxu0 0.0
  %282 = vmatpush1.msra.mxu0 %v245
  %283 = vmatprep.subr.mxu0 0.0
  %284 = vmatpush1.msra.mxu0 %v246
  %285 = vmatprep.subr.mxu0 0.0
  %286 = vmatpush1.msra.mxu0 %v247
  %287 = vmatprep.subr.mxu0 0.0
  %288 = vmatpush1.msra.mxu0 0.0
  %289 = vmatprep.subr.mxu0 0.0
  %290 = vmatpush1.msra.mxu0 0.0
  %291 = vmatprep.subr.mxu0 0.0
  %292 = vmatpush1.msra.mxu0 0.0
  %293 = vmatprep.subr.mxu0 0.0
  %294 = vmatpush1.msra.mxu0 0.0
  %295 = vmatprep.subr.mxu0 0.0
  %296 = vmatpush1.msra.mxu0 0.0
  %297 = vmatprep.subr.mxu0 0.0
  %298 = vmatpush1.msra.mxu0 0.0
  %299 = vmatprep.subr.mxu0 0.0
  %300 = vmatpush1.msra.mxu0 0.0
  %301 = vmatprep.subr.mxu0 0.0
  %302 = vmatpush1.msra.mxu0 0.0
  %303 = vmatprep.subr.mxu0 0.0
  %304 = vmatpush1.msra.mxu0 0.0
  %305 = vmatprep.subr.mxu0 0.0
  %306 = vmatpush1.msra.mxu0 0.0
  %307 = vmatprep.subr.mxu0 0.0
  %308 = vmatpush1.msra.mxu0 0.0
  %309 = vmatprep.subr.mxu0 0.0
  %310 = vmatpush1.msra.mxu0 0.0
  %311 = vmatprep.subr.mxu0 0.0
  %312 = vmatpush1.msra.mxu0 0.0
  %313 = vmatprep.subr.mxu0 0.0
  %314 = vmatpush1.msra.mxu0 0.0
  %315 = vmatprep.subr.mxu0 0.0
  %316 = vmatpush1.msra.mxu0 0.0
  %317 = vmatprep.subr.mxu0 0.0
  %318 = vmatpush1.msra.mxu0 0.0
  %319 = vmatprep.mubr.f32.mxu0 0.0
  %320 = vmatmul.mubr.f32.gmra.mrb[0].mxu0 %v248
  %v321 = vpop.f32.mrb[0].mxu0
  %v322 = vadd.f32 %v253, %v321
  %v323 = vpop.f32.mrb[0].mxu0
  %324 = vdwg.mxu0
  %325 = vst [vmem:[%s4] sm:$0x3] %v322
  // Predicated region
  $region18: #{qvalue_net.1} parent=0 // pred_check
    _
  $region19: #{qvalue_net.1} parent=0 // pred_check_branch
    %327 = sbr.rel (0) target = $region21
  $region20: #{qvalue_net.1} parent=0 // pred_region
    _
  $region21: #{qvalue_net.1} parent=0 // pred_fallthru
    _
  // Predicated region
  $region22: #{qvalue_net.1} parent=0 // pred_check
    _
  $region23: #{qvalue_net.1} parent=0 // pred_check_branch
    %329 = sbr.rel (0) target = $region25
  $region24: #{qvalue_net.1} parent=0 // pred_region
    _
  $region25: #{qvalue_net.1} parent=0 // pred_fallthru
    _

</llo_original>
